<compile_context>
chip_gen: v7x
topology: tpu7x:2x2x1
jax: 0.10.0
libtpu: 0.0.40
codegen_flags: <defaults>
</compile_context>

<pallas_src>
import math
import numpy as np
import jax
import jax.numpy as jnp
from jax.experimental import pallas as pl
from jax.experimental.pallas import tpu as pltpu


# -----------------------------------------------------------------------------
# Pallas kernel: full policy_network.forward
#   p_dis = fc2(relu(fc1(g_t)))
#   h1    = i2h(cat(p_dis, g_t));  h2 = h2h(h_prev)
#   h_t   = GRUCell(h1 + h2, h_prev)
#   logit = fc_pi(h_t)
#
# bias slab rows (f32, packed host-side, each row lane-offset 0):
#   0: fc1 bias            (n_inter)
#   1: fc2 bias            (1)
#   2: i2h p_dis column    (n_hid)
#   3: i2h bias + h2h bias (n_hid)
#   4: b_ih[r,z]+b_hh[r,z] (2*n_hid)
#   5: b_ih[n]             (n_hid)
#   6: b_hh[n]             (n_hid)
#   7: fc_pi bias          (n_action)
# -----------------------------------------------------------------------------
def _policy_kernel(g_ref, h_ref, wg_ref, w2_ref, wh_ref, wih_ref, wpi_ref,
                   b_ref, h_out_ref, logit_ref, pdis_ref):
    g = g_ref[...]                                   # (B, n_input) f32
    h = h_ref[...]                                   # (B, n_hid)   f32
    n_hid = h_ref.shape[1]
    n_inter = wg_ref.shape[1] - n_hid
    n_action = logit_ref.shape[1]

    # bf16 MXU matmuls, f32 accumulation.
    def dot(a, w_ref):
        return jnp.dot(a.astype(jnp.bfloat16), w_ref[...],
                       preferred_element_type=jnp.float32)

    def bias(i, w):
        return b_ref[i:i + 1, :w]                    # (1, w) f32, broadcasts over B

    # --- g_t path: fc1 and i2h(g_t columns) fused into one MXU push
    gcat = dot(g, wg_ref)                            # (B, n_inter + n_hid)
    a1 = jnp.maximum(gcat[:, :n_inter] + bias(0, n_inter), 0.0)   # relu(fc1(g_t))
    p_dis = dot(a1, w2_ref) + bias(1, 1)             # (B, 1)  fc2

    # --- h_prev path: h2h and GRU weight_hh fused into one MXU push
    hcat = dot(h, wh_ref)                            # (B, 4*n_hid)

    # x = i2h(cat(p_dis, g_t)) + h2h(h_prev); p_dis column as broadcast multiply
    x = (gcat[:, n_inter:] + p_dis * bias(2, n_hid)
         + hcat[:, :n_hid] + bias(3, n_hid))         # (B, n_hid)

    # --- GRUCell(x, h_prev)
    gi = dot(x, wih_ref)                             # (B, 3*n_hid), biases folded below
    rz = jax.nn.sigmoid(gi[:, :2 * n_hid] + hcat[:, n_hid:3 * n_hid]
                        + bias(4, 2 * n_hid))
    r, z = rz[:, :n_hid], rz[:, n_hid:]
    n = jnp.tanh(gi[:, 2 * n_hid:] + bias(5, n_hid)
                 + r * (hcat[:, 3 * n_hid:] + bias(6, n_hid)))
    h_t = (1.0 - z) * n + z * h                      # (B, n_hid)

    logit = dot(h_t, wpi_ref) + bias(7, n_action)    # (B, n_action)

    h_out_ref[...] = h_t
    logit_ref[...] = logit
    pdis_ref[...] = p_dis


def policy_forward(g_t, h_prev, kp):
    """Run policy_network.forward. Returns (h_t, logit, p_dis)."""
    B = g_t.shape[0]
    n_hid = h_prev.shape[1]
    n_action = kp['w_pi'].shape[1]

    inputs = (g_t.astype(jnp.float32), h_prev.astype(jnp.float32),
              kp['wg'], kp['w2'], kp['wh'], kp['wih'], kp['w_pi'], kp['bias'])

    # Gridless call: whole arrays live in VMEM, no pipelining / double-buffering.
    vmem = lambda: pl.BlockSpec(memory_space=pltpu.MemorySpace.VMEM)
    return pl.pallas_call(
        _policy_kernel,
        out_shape=(jax.ShapeDtypeStruct((B, n_hid), jnp.float32),
                   jax.ShapeDtypeStruct((B, n_action), jnp.float32),
                   jax.ShapeDtypeStruct((B, 1), jnp.float32)),
        in_specs=[vmem() for _ in inputs],
        out_specs=(vmem(), vmem(), vmem()),
    )(*inputs)


# -----------------------------------------------------------------------------
# Parameter init (torch-layout, PyTorch-style uniform fan-in init) and the
# fused / transposed / packed kernel-layout view of the same parameters.
# -----------------------------------------------------------------------------
def init_params(key, n_hid, n_input, n_action, n_inter):
    def uni(k, shape, fan_in):
        s = 1.0 / math.sqrt(fan_in)
        return jax.random.uniform(k, shape, jnp.float32, -s, s)

    ks = jax.random.split(key, 14)
    return dict(
        fc1_w=uni(ks[0], (n_inter, n_input), n_input),
        fc1_b=uni(ks[1], (n_inter,), n_input),
        fc2_w=uni(ks[2], (1, n_inter), n_inter),
        fc2_b=uni(ks[3], (1,), n_inter),
        i2h_w=uni(ks[4], (n_hid, n_input + 1), n_input + 1),
        i2h_b=uni(ks[5], (n_hid,), n_input + 1),
        h2h_w=uni(ks[6], (n_hid, n_hid), n_hid),
        h2h_b=uni(ks[7], (n_hid,), n_hid),
        gru_wih=uni(ks[8], (3 * n_hid, n_hid), n_hid),
        gru_whh=uni(ks[9], (3 * n_hid, n_hid), n_hid),
        gru_bih=uni(ks[10], (3 * n_hid,), n_hid),
        gru_bhh=uni(ks[11], (3 * n_hid,), n_hid),
        fc_pi_w=uni(ks[12], (n_action, n_hid), n_hid),
        fc_pi_b=uni(ks[13], (n_action,), n_hid),
    )


def to_kernel_params(P):
    bf16 = jnp.bfloat16
    n_hid = P['h2h_w'].shape[0]

    w1_t = P['fc1_w'].T                      # (n_input, n_inter)
    wi2h_t = P['i2h_w'].T                    # (n_input+1, n_hid), row 0 = p_dis column
    wh2h_t = P['h2h_w'].T                    # (n_hid, n_hid)
    whh_t = P['gru_whh'].T                   # (n_hid, 3*n_hid)

    # fc1 and i2h(g_t part) fused along the output axis
    wg = jnp.concatenate([w1_t, wi2h_t[1:]], axis=1).astype(bf16)
    # h2h and GRU weight_hh fused along the output axis
    wh = jnp.concatenate([wh2h_t, whh_t], axis=1).astype(bf16)

    # All element-wise constants packed into one f32 slab (8 rows, lane-padded).
    rows = [
        np.asarray(P['fc1_b'], np.float32),                                  # 0
        np.asarray(P['fc2_b'], np.float32),                                  # 1
        np.asarray(wi2h_t[0], np.float32),                                   # 2
        np.asarray(P['i2h_b'], np.float32) + np.asarray(P['h2h_b'], np.float32),           # 3
        np.asarray(P['gru_bih'][:2 * n_hid], np.float32)
        + np.asarray(P['gru_bhh'][:2 * n_hid], np.float32),                  # 4
        np.asarray(P['gru_bih'][2 * n_hid:], np.float32),                    # 5
        np.asarray(P['gru_bhh'][2 * n_hid:], np.float32),                    # 6
        np.asarray(P['fc_pi_b'], np.float32),                                # 7
    ]
    width = max(int(r.shape[0]) for r in rows)
    width = ((width + 127) // 128) * 128
    bias = np.zeros((8, width), np.float32)
    for i, r in enumerate(rows):
        bias[i, :r.shape[0]] = r

    return dict(
        wg=wg,
        w2=P['fc2_w'].T.astype(bf16),
        wh=wh,
        wih=P['gru_wih'].T.astype(bf16),
        w_pi=P['fc_pi_w'].T.astype(bf16),
        bias=jnp.asarray(bias),
    )


# -----------------------------------------------------------------------------
# NumPy reference mirroring the torch forward exactly (f32)
# -----------------------------------------------------------------------------
def policy_reference(g, h_prev, P):
    g = np.asarray(g, np.float32)
    h = np.asarray(h_prev, np.float32)
    lin = lambda x, w, b: x @ np.asarray(w, np.float32).T + np.asarray(b, np.float32)

    a1 = np.maximum(lin(g, P['fc1_w'], P['fc1_b']), 0.0)
    p_dis = lin(a1, P['fc2_w'], P['fc2_b'])
    inputs = np.concatenate([p_dis, g], axis=1)
    x = lin(inputs, P['i2h_w'], P['i2h_b']) + lin(h, P['h2h_w'], P['h2h_b'])
    gi = lin(x, P['gru_wih'], P['gru_bih'])
    gh = lin(h, P['gru_whh'], P['gru_bhh'])
    n_hid = h.shape[1]
    i_r, i_z, i_n = gi[:, :n_hid], gi[:, n_hid:2 * n_hid], gi[:, 2 * n_hid:]
    h_r, h_z, h_n = gh[:, :n_hid], gh[:, n_hid:2 * n_hid], gh[:, 2 * n_hid:]
    sig = lambda v: 1.0 / (1.0 + np.exp(-v))
    r, z = sig(i_r + h_r), sig(i_z + h_z)
    n = np.tanh(i_n + r * h_n)
    h_t = (1.0 - z) * n + z * h
    logit = lin(h_t, P['fc_pi_w'], P['fc_pi_b'])
    return h_t, logit, p_dis


if __name__ == "__main__":
    key = jax.random.PRNGKey(0)
    B, n_hid, n_input, n_action, n_inter = 2, 32, 32, 8, 16

    kparams, kg, kh = jax.random.split(key, 3)
    P = init_params(kparams, n_hid, n_input, n_action, n_inter)
    KP = to_kernel_params(P)

    g_t = jax.random.normal(kg, (B, n_input), jnp.float32)
    h_prev = jax.random.normal(kh, (B, n_hid), jnp.float32)

    h_t, logit, p_dis = policy_forward(g_t, h_prev, KP)
    jax.block_until_ready((h_t, logit, p_dis))

    h_ref, logit_ref, p_ref = policy_reference(g_t, h_prev, P)
    np.testing.assert_allclose(np.asarray(p_dis), p_ref, rtol=3e-2, atol=3e-2)
    np.testing.assert_allclose(np.asarray(h_t), h_ref, rtol=3e-2, atol=3e-2)
    np.testing.assert_allclose(np.asarray(logit), logit_ref, rtol=3e-2, atol=3e-2)
    print("KERNEL_OK")
</pallas_src>

<mosaic_0001>
module attributes {stable_mosaic.version = 11 : i64} {
  func.func @_policy_kernel(%arg0: memref<2x32xf32, #tpu.memory_space<vmem>>, %arg1: memref<2x32xf32, #tpu.memory_space<vmem>>, %arg2: memref<32x48xbf16, #tpu.memory_space<vmem>>, %arg3: memref<16x1xbf16, #tpu.memory_space<vmem>>, %arg4: memref<32x128xbf16, #tpu.memory_space<vmem>>, %arg5: memref<32x96xbf16, #tpu.memory_space<vmem>>, %arg6: memref<32x8xbf16, #tpu.memory_space<vmem>>, %arg7: memref<8x128xf32, #tpu.memory_space<vmem>>, %arg8: memref<2x32xf32, #tpu.memory_space<vmem>>, %arg9: memref<2x8xf32, #tpu.memory_space<vmem>>, %arg10: memref<2x1xf32, #tpu.memory_space<vmem>>) attributes {dimension_semantics = [], scalar_prefetch = 0 : i64, scratch_operands = 0 : i64, tpu.core_type = #tpu.core_type<tc>} {
    %c0 = arith.constant 0 : index
    %c0_0 = arith.constant 0 : index
    %0 = vector.load %arg0[%c0, %c0_0] : memref<2x32xf32, #tpu.memory_space<vmem>>, vector<2x32xf32>
    %c0_1 = arith.constant 0 : index
    %c0_2 = arith.constant 0 : index
    %1 = vector.load %arg1[%c0_1, %c0_2] : memref<2x32xf32, #tpu.memory_space<vmem>>, vector<2x32xf32>
    %2 = arith.truncf %0 : vector<2x32xf32> to vector<2x32xbf16>
    %c0_3 = arith.constant 0 : index
    %c0_4 = arith.constant 0 : index
    %3 = vector.load %arg2[%c0_3, %c0_4] : memref<32x48xbf16, #tpu.memory_space<vmem>>, vector<32x48xbf16>
    %cst = arith.constant dense<0.000000e+00> : vector<2x48xf32>
    %4 = tpu.matmul %2, %3, %cst {dimension_numbers = #tpu.dot_dimension_numbers<[1], [0], [0], [1], [0, 0, 1, 1], [], []>} : vector<2x32xbf16>, vector<32x48xbf16>, vector<2x48xf32> -> vector<2x48xf32>
    %5 = vector.extract_strided_slice %4 {offsets = [0, 0], sizes = [2, 16], strides = [1, 1]} : vector<2x48xf32> to vector<2x16xf32>
    %c0_5 = arith.constant 0 : index
    %c0_6 = arith.constant 0 : index
    %6 = vector.load %arg7[%c0_5, %c0_6] : memref<8x128xf32, #tpu.memory_space<vmem>>, vector<1x16xf32>
    %7 = vector.broadcast %6 : vector<1x16xf32> to vector<2x16xf32>
    %8 = arith.addf %5, %7 : vector<2x16xf32>
    %cst_7 = arith.constant 0.000000e+00 : f32
    %9 = vector.broadcast %cst_7 : f32 to vector<2x16xf32>
    %10 = arith.maximumf %8, %9 : vector<2x16xf32>
    %11 = arith.truncf %10 : vector<2x16xf32> to vector<2x16xbf16>
    %c0_8 = arith.constant 0 : index
    %c0_9 = arith.constant 0 : index
    %12 = vector.load %arg3[%c0_8, %c0_9] : memref<16x1xbf16, #tpu.memory_space<vmem>>, vector<16x1xbf16>
    %cst_10 = arith.constant dense<0.000000e+00> : vector<2x1xf32>
    %13 = tpu.matmul %11, %12, %cst_10 {dimension_numbers = #tpu.dot_dimension_numbers<[1], [0], [0], [1], [0, 0, 1, 1], [], []>} : vector<2x16xbf16>, vector<16x1xbf16>, vector<2x1xf32> -> vector<2x1xf32>
    %c1 = arith.constant 1 : index
    %c0_11 = arith.constant 0 : index
    %14 = vector.load %arg7[%c1, %c0_11] : memref<8x128xf32, #tpu.memory_space<vmem>>, vector<1x1xf32>
    %15 = vector.broadcast %14 : vector<1x1xf32> to vector<2x1xf32>
    %16 = arith.addf %13, %15 : vector<2x1xf32>
    %17 = arith.truncf %1 : vector<2x32xf32> to vector<2x32xbf16>
    %c0_12 = arith.constant 0 : index
    %c0_13 = arith.constant 0 : index
    %18 = vector.load %arg4[%c0_12, %c0_13] : memref<32x128xbf16, #tpu.memory_space<vmem>>, vector<32x128xbf16>
    %cst_14 = arith.constant dense<0.000000e+00> : vector<2x128xf32>
    %19 = tpu.matmul %17, %18, %cst_14 {dimension_numbers = #tpu.dot_dimension_numbers<[1], [0], [0], [1], [0, 0, 1, 1], [], []>} : vector<2x32xbf16>, vector<32x128xbf16>, vector<2x128xf32> -> vector<2x128xf32>
    %20 = vector.extract_strided_slice %4 {offsets = [0, 16], sizes = [2, 32], strides = [1, 1]} : vector<2x48xf32> to vector<2x32xf32>
    %c2 = arith.constant 2 : index
    %c0_15 = arith.constant 0 : index
    %21 = vector.load %arg7[%c2, %c0_15] : memref<8x128xf32, #tpu.memory_space<vmem>>, vector<1x32xf32>
    %22 = vector.broadcast %16 : vector<2x1xf32> to vector<2x32xf32>
    %23 = vector.broadcast %21 : vector<1x32xf32> to vector<2x32xf32>
    %24 = arith.mulf %22, %23 : vector<2x32xf32>
    %25 = arith.addf %20, %24 : vector<2x32xf32>
    %26 = vector.extract_strided_slice %19 {offsets = [0, 0], sizes = [2, 32], strides = [1, 1]} : vector<2x128xf32> to vector<2x32xf32>
    %27 = arith.addf %25, %26 : vector<2x32xf32>
    %c3 = arith.constant 3 : index
    %c0_16 = arith.constant 0 : index
    %28 = vector.load %arg7[%c3, %c0_16] : memref<8x128xf32, #tpu.memory_space<vmem>>, vector<1x32xf32>
    %29 = vector.broadcast %28 : vector<1x32xf32> to vector<2x32xf32>
    %30 = arith.addf %27, %29 : vector<2x32xf32>
    %31 = arith.truncf %30 : vector<2x32xf32> to vector<2x32xbf16>
    %c0_17 = arith.constant 0 : index
    %c0_18 = arith.constant 0 : index
    %32 = vector.load %arg5[%c0_17, %c0_18] : memref<32x96xbf16, #tpu.memory_space<vmem>>, vector<32x96xbf16>
    %cst_19 = arith.constant dense<0.000000e+00> : vector<2x96xf32>
    %33 = tpu.matmul %31, %32, %cst_19 {dimension_numbers = #tpu.dot_dimension_numbers<[1], [0], [0], [1], [0, 0, 1, 1], [], []>} : vector<2x32xbf16>, vector<32x96xbf16>, vector<2x96xf32> -> vector<2x96xf32>
    %34 = vector.extract_strided_slice %33 {offsets = [0, 0], sizes = [2, 64], strides = [1, 1]} : vector<2x96xf32> to vector<2x64xf32>
    %35 = vector.extract_strided_slice %19 {offsets = [0, 32], sizes = [2, 64], strides = [1, 1]} : vector<2x128xf32> to vector<2x64xf32>
    %36 = arith.addf %34, %35 : vector<2x64xf32>
    %c4 = arith.constant 4 : index
    %c0_20 = arith.constant 0 : index
    %37 = vector.load %arg7[%c4, %c0_20] : memref<8x128xf32, #tpu.memory_space<vmem>>, vector<1x64xf32>
    %38 = vector.broadcast %37 : vector<1x64xf32> to vector<2x64xf32>
    %39 = arith.addf %36, %38 : vector<2x64xf32>
    %40 = arith.negf %39 : vector<2x64xf32>
    %41 = math.exp %40 : vector<2x64xf32>
    %cst_21 = arith.constant 1.000000e+00 : f32
    %42 = vector.broadcast %cst_21 : f32 to vector<2x64xf32>
    %43 = arith.addf %42, %41 : vector<2x64xf32>
    %44 = arith.divf %42, %43 : vector<2x64xf32>
    %45 = vector.extract_strided_slice %44 {offsets = [0, 0], sizes = [2, 32], strides = [1, 1]} : vector<2x64xf32> to vector<2x32xf32>
    %46 = vector.extract_strided_slice %44 {offsets = [0, 32], sizes = [2, 32], strides = [1, 1]} : vector<2x64xf32> to vector<2x32xf32>
    %47 = vector.extract_strided_slice %33 {offsets = [0, 64], sizes = [2, 32], strides = [1, 1]} : vector<2x96xf32> to vector<2x32xf32>
    %c5 = arith.constant 5 : index
    %c0_22 = arith.constant 0 : index
    %48 = vector.load %arg7[%c5, %c0_22] : memref<8x128xf32, #tpu.memory_space<vmem>>, vector<1x32xf32>
    %49 = vector.broadcast %48 : vector<1x32xf32> to vector<2x32xf32>
    %50 = arith.addf %47, %49 : vector<2x32xf32>
    %51 = vector.extract_strided_slice %19 {offsets = [0, 96], sizes = [2, 32], strides = [1, 1]} : vector<2x128xf32> to vector<2x32xf32>
    %c6 = arith.constant 6 : index
    %c0_23 = arith.constant 0 : index
    %52 = vector.load %arg7[%c6, %c0_23] : memref<8x128xf32, #tpu.memory_space<vmem>>, vector<1x32xf32>
    %53 = vector.broadcast %52 : vector<1x32xf32> to vector<2x32xf32>
    %54 = arith.addf %51, %53 : vector<2x32xf32>
    %55 = arith.mulf %45, %54 : vector<2x32xf32>
    %56 = arith.addf %50, %55 : vector<2x32xf32>
    %57 = math.tanh %56 : vector<2x32xf32>
    %cst_24 = arith.constant 1.000000e+00 : f32
    %58 = vector.broadcast %cst_24 : f32 to vector<2x32xf32>
    %59 = arith.subf %58, %46 : vector<2x32xf32>
    %60 = arith.mulf %59, %57 : vector<2x32xf32>
    %61 = arith.mulf %46, %1 : vector<2x32xf32>
    %62 = arith.addf %60, %61 : vector<2x32xf32>
    %63 = arith.truncf %62 : vector<2x32xf32> to vector<2x32xbf16>
    %c0_25 = arith.constant 0 : index
    %c0_26 = arith.constant 0 : index
    %64 = vector.load %arg6[%c0_25, %c0_26] : memref<32x8xbf16, #tpu.memory_space<vmem>>, vector<32x8xbf16>
    %cst_27 = arith.constant dense<0.000000e+00> : vector<2x8xf32>
    %65 = tpu.matmul %63, %64, %cst_27 {dimension_numbers = #tpu.dot_dimension_numbers<[1], [0], [0], [1], [0, 0, 1, 1], [], []>} : vector<2x32xbf16>, vector<32x8xbf16>, vector<2x8xf32> -> vector<2x8xf32>
    %c7 = arith.constant 7 : index
    %c0_28 = arith.constant 0 : index
    %66 = vector.load %arg7[%c7, %c0_28] : memref<8x128xf32, #tpu.memory_space<vmem>>, vector<1x8xf32>
    %67 = vector.broadcast %66 : vector<1x8xf32> to vector<2x8xf32>
    %68 = arith.addf %65, %67 : vector<2x8xf32>
    %c0_29 = arith.constant 0 : index
    %c0_30 = arith.constant 0 : index
    %69 = vector.load %arg8[%c0_29, %c0_30] : memref<2x32xf32, #tpu.memory_space<vmem>>, vector<2x32xf32>
    tpu.vector_store %arg8[%c0_29, %c0_30], %62 {strides = array<i32>} : memref<2x32xf32, #tpu.memory_space<vmem>>, vector<2x32xf32>,
    %c0_31 = arith.constant 0 : index
    %c0_32 = arith.constant 0 : index
    %70 = vector.load %arg9[%c0_31, %c0_32] : memref<2x8xf32, #tpu.memory_space<vmem>>, vector<2x8xf32>
    tpu.vector_store %arg9[%c0_31, %c0_32], %68 {strides = array<i32>} : memref<2x8xf32, #tpu.memory_space<vmem>>, vector<2x8xf32>,
    %c0_33 = arith.constant 0 : index
    %c0_34 = arith.constant 0 : index
    %71 = vector.load %arg10[%c0_33, %c0_34] : memref<2x1xf32, #tpu.memory_space<vmem>>, vector<2x1xf32>
    tpu.vector_store %arg10[%c0_33, %c0_34], %16 {strides = array<i32>} : memref<2x1xf32, #tpu.memory_space<vmem>>, vector<2x1xf32>,
    return
  }
}

</mosaic_0001>

<llo_original>
// kernel: tpu_custom_call.1
$region0: #{tpu_custom_call.1}
  #allocation0 [shape = 'u32[]', space=smem, size = 0x4, offset = 0x4, fixed_abs, tag = 'smem constant byte address 0x4 - core index']
  #allocation1 [shape = 'u32[144,128]{1,0:T(1,128)}', space=vmem, size = 0x12000, scoped, tag = 'internal scratch']
  %s0 = inlined_call_operand.hbm [shape: f32[2,32], index: 0, kind: input, shape index: {}]
  %s1 = inlined_call_operand.hbm [shape: f32[2,32], index: 1, kind: input, shape index: {}]
  %s2 = inlined_call_operand.vmem [shape: bf16[32,48], index: 2, kind: input, shape index: {}]
  %s3 = inlined_call_operand.vmem [shape: bf16[16,1], index: 3, kind: input, shape index: {}]
  %s4 = inlined_call_operand.vmem [shape: bf16[32,128], index: 4, kind: input, shape index: {}]
  %s5 = inlined_call_operand.hbm [shape: bf16[32,96], index: 5, kind: input, shape index: {}]
  %s6 = inlined_call_operand.vmem [shape: bf16[32,8], index: 6, kind: input, shape index: {}]
  %s7 = inlined_call_operand.vmem [shape: f32[8,128], index: 7, kind: input, shape index: {}]
  %s8 = inlined_call_operand.hbm [shape: f32[2,32], index: 8, kind: output, shape index: {0}]
  %s9 = inlined_call_operand.hbm [shape: f32[2,8], index: 9, kind: output, shape index: {1}]
  %s10 = inlined_call_operand.vmem [shape: f32[2,1], index: 10, kind: output, shape index: {2}]
  %11 = xla_tuple %s8, %s9, %s10
  %s12 = sld [smem:[#allocation0]]
  $region70: #{tpu_custom_call.1} parent=0
    _
  %s14 = ssub.s32 1, %s12
  %s15 = scalar_select 0, %s14, %s12
  $region1: #{tpu_custom_call.1} parent=0
    #allocation2 [shape = 'u8[1024]{0}', space=vmem, size = 0x400, scoped, tag = 'input window, operand 0, single buffered']
    #allocation3 [shape = 's32[1]{0}', space=sflag, size = 0x4, scoped, tag = 'scoped memory for tpu_custom_call.1']
    #allocation4 [shape = 's32[1]{0}', space=sflag, size = 0x4, scoped, tag = 'scoped memory for tpu_custom_call.1']
    #allocation5 [shape = 'u8[1024]{0}', space=vmem, size = 0x400, scoped, tag = 'input window, operand 1, single buffered']
    #allocation6 [shape = 's32[1]{0}', space=sflag, size = 0x4, scoped, tag = 'scoped memory for tpu_custom_call.1']
    #allocation7 [shape = 'u8[8192]{0}', space=vmem, size = 0x2000, scoped, tag = 'input window, operand 5, single buffered']
    #allocation8 [shape = 'u8[1024]{0}', space=vmem, size = 0x400, scoped, tag = 'output window, operand 0, single buffered']
    #allocation9 [shape = 'u8[1024]{0}', space=vmem, size = 0x400, scoped, tag = 'output window, operand 1, single buffered']
    #allocation10 [shape = 's32[1]{0}', space=sflag, size = 0x4, scoped, tag = 'scoped memory for tpu_custom_call.1']
    %16 = vsyncpa [#allocation3], 0
    %17 = vsyncpa [#allocation6], 0
    %18 = vsyncpa [#allocation4], 0
    %19 = vsyncpa [#allocation10], 0
    // Predicated region
    $region2: #{tpu_custom_call.1} parent=1 // pred_check
      _
    $region3: #{tpu_custom_call.1} parent=1 // pred_check_branch
      %21 = sbr.rel (0) target = $region5
    $region4: #{tpu_custom_call.1} parent=1 // pred_region
      %s23 = ssub.s32 32, 32
      %24 = vsyncadd [#allocation3], %s23
      %s26 = sshll.u32 [#allocation2], 4
      %s27 = int_to_ptr.vmem [resolvable:$true] %s26
      %29 = dma.hbm_to_vmem [thread:$0]  %s0, 32, %s27, [#allocation3]
    $region5: #{tpu_custom_call.1} parent=1 // pred_fallthru
      _
    // Predicated region
    $region6: #{tpu_custom_call.1} parent=1 // pred_check
      _
    $region7: #{tpu_custom_call.1} parent=1 // pred_check_branch
      %31 = sbr.rel (0) target = $region9
    $region8: #{tpu_custom_call.1} parent=1 // pred_region
      %s33 = ssub.s32 32, 32
      %34 = vsyncadd [#allocation6], %s33
      %s36 = sshll.u32 [#allocation5], 4
      %s37 = int_to_ptr.vmem [resolvable:$true] %s36
      %39 = dma.hbm_to_vmem [thread:$0]  %s1, 32, %s37, [#allocation6]
    $region9: #{tpu_custom_call.1} parent=1 // pred_fallthru
      _
    // Predicated region
    $region10: #{tpu_custom_call.1} parent=1 // pred_check
      _
    $region11: #{tpu_custom_call.1} parent=1 // pred_check_branch
      %41 = sbr.rel (0) target = $region13
    $region12: #{tpu_custom_call.1} parent=1 // pred_region
      _
    $region13: #{tpu_custom_call.1} parent=1 // pred_fallthru
      _
    // Predicated region
    $region14: #{tpu_custom_call.1} parent=1 // pred_check
      _
    $region15: #{tpu_custom_call.1} parent=1 // pred_check_branch
      %43 = sbr.rel (0) target = $region17
    $region16: #{tpu_custom_call.1} parent=1 // pred_region
      _
    $region17: #{tpu_custom_call.1} parent=1 // pred_fallthru
      _
    // Predicated region
    $region18: #{tpu_custom_call.1} parent=1 // pred_check
      _
    $region19: #{tpu_custom_call.1} parent=1 // pred_check_branch
      %45 = sbr.rel (0) target = $region21
    $region20: #{tpu_custom_call.1} parent=1 // pred_region
      _
    $region21: #{tpu_custom_call.1} parent=1 // pred_fallthru
      _
    // Predicated region
    $region22: #{tpu_custom_call.1} parent=1 // pred_check
      _
    $region23: #{tpu_custom_call.1} parent=1 // pred_check_branch
      %47 = sbr.rel (0) target = $region25
    $region24: #{tpu_custom_call.1} parent=1 // pred_region
      %s49 = ssub.s32 256, 256
      %50 = vsyncadd [#allocation6], %s49
      %s51 = sshll.u32 [#allocation7], 4
      %s52 = int_to_ptr.vmem [resolvable:$true] %s51
      %57 = dma.hbm_to_vmem [thread:$0]  %s5, 256, %s52, [#allocation6], 64, 64, 4
    $region25: #{tpu_custom_call.1} parent=1 // pred_fallthru
      _
    // Predicated region
    $region26: #{tpu_custom_call.1} parent=1 // pred_check
      _
    $region27: #{tpu_custom_call.1} parent=1 // pred_check_branch
      %59 = sbr.rel (0) target = $region29
    $region28: #{tpu_custom_call.1} parent=1 // pred_region
      _
    $region29: #{tpu_custom_call.1} parent=1 // pred_fallthru
      _
    // Predicated region
    $region30: #{tpu_custom_call.1} parent=1 // pred_check
      _
    $region31: #{tpu_custom_call.1} parent=1 // pred_check_branch
      %61 = sbr.rel (0) target = $region33
    $region32: #{tpu_custom_call.1} parent=1 // pred_region
      _
    $region33: #{tpu_custom_call.1} parent=1 // pred_fallthru
      _
    // Predicated region
    $region34: #{tpu_custom_call.1} parent=1 // pred_check
      _
    $region35: #{tpu_custom_call.1} parent=1 // pred_check_branch
      %63 = sbr.rel (0) target = $region37
    $region36: #{tpu_custom_call.1} parent=1 // pred_region
      %64 = dma.done [#allocation3], 32
    $region37: #{tpu_custom_call.1} parent=1 // pred_fallthru
      _
    // Predicated region
    $region38: #{tpu_custom_call.1} parent=1 // pred_check
      _
    $region39: #{tpu_custom_call.1} parent=1 // pred_check_branch
      %66 = sbr.rel (0) target = $region41
    $region40: #{tpu_custom_call.1} parent=1 // pred_region
      %67 = dma.done [#allocation6], 32
    $region41: #{tpu_custom_call.1} parent=1 // pred_fallthru
      _
    // Predicated region
    $region42: #{tpu_custom_call.1} parent=1 // pred_check
      _
    $region43: #{tpu_custom_call.1} parent=1 // pred_check_branch
      %69 = sbr.rel (0) target = $region45
    $region44: #{tpu_custom_call.1} parent=1 // pred_region
      %70 = dma.done [#allocation6], 256
    $region45: #{tpu_custom_call.1} parent=1 // pred_fallthru
      _
    %v72 = vld [vmem:[#allocation2] sm:$0x3]
    %v73 = vld [vmem:[#allocation5] sm:$0x3]
    %v74 = vpack.c.bf16 %v72, %v72
    %v75 = vld [vmem:[%s2] sm:$0xf]
    %v76 = vld [vmem:[%s2 + $0x4] sm:$0xf]
    %v77 = vld [vmem:[%s2 + $0x8] sm:$0xf]
    %v78 = vld [vmem:[%s2 + $0xc] sm:$0xf]
    %v83 = vunpack.c.l.b16 %v75
    %v84 = vunpack.c.l.b16 %v76
    %v85 = vunpack.c.l.b16 %v77
    %v86 = vunpack.c.l.b16 %v78
    %v87 = vpack.c.b16 %v84, %v83
    %v88 = vpack.c.b16 %v86, %v85
    %vm91 = vcmask 261120
    %v93 = vsel %vm91, %v74, 0
    %95 = vmatprep.subr.bf16.mxu0 0
    %96 = vmatpush1.bf16.msra.mxu0 %v87
    %97 = vmatprep.subr.bf16.mxu0 0
    %98 = vmatpush1.bf16.msra.mxu0 %v88
    %99 = vmatprep.subr.bf16.mxu0 0
    %100 = vmatpush1.bf16.msra.mxu0 0
    %101 = vmatprep.subr.bf16.mxu0 0
    %102 = vmatpush1.bf16.msra.mxu0 0
    %103 = vmatprep.subr.bf16.mxu0 0
    %104 = vmatpush1.bf16.msra.mxu0 0
    %105 = vmatprep.subr.bf16.mxu0 0
    %106 = vmatpush1.bf16.msra.mxu0 0
    %107 = vmatprep.subr.bf16.mxu0 0
    %108 = vmatpush1.bf16.msra.mxu0 0
    %109 = vmatprep.subr.bf16.mxu0 0
    %110 = vmatpush1.bf16.msra.mxu0 0
    %111 = vmatprep.subr.bf16.mxu0 0
    %112 = vmatpush1.bf16.msra.mxu0 0
    %113 = vmatprep.subr.bf16.mxu0 0
    %114 = vmatpush1.bf16.msra.mxu0 0
    %115 = vmatprep.subr.bf16.mxu0 0
    %116 = vmatpush1.bf16.msra.mxu0 0
    %117 = vmatprep.subr.bf16.mxu0 0
    %118 = vmatpush1.bf16.msra.mxu0 0
    %119 = vmatprep.subr.bf16.mxu0 0
    %120 = vmatpush1.bf16.msra.mxu0 0
    %121 = vmatprep.subr.bf16.mxu0 0
    %122 = vmatpush1.bf16.msra.mxu0 0
    %123 = vmatprep.subr.bf16.mxu0 0
    %124 = vmatpush1.bf16.msra.mxu0 0
    %125 = vmatprep.subr.bf16.mxu0 0
    %126 = vmatpush1.bf16.msra.mxu0 0
    %127 = vmatprep.mubr.bf16.mxu0 0
    %128 = vmatmul.mubr.bf16.gmra.mrb[0].mxu0 %v93
    %v129 = vpop.f32.mrb[0].mxu0
    %v130 = vadd.f32 0.0, %v129
    %v131 = vpop.f32.mrb[0].mxu0
    %v132 = vpop.f32.mrb[0].mxu0
    %v133 = vpop.f32.mrb[0].mxu0
    %134 = vdwg.mxu0
    %v135 = vld [vmem:[%s7] sm:$0x1]
    %v136 = vlaneseq
    %v137 = vshrl.u32 %v136, 7
    %v138 = vsub.s32 0, %v137
    %v139 = vrot.slane %v135, %v138
    %v140 = vadd.f32 %v130, %v139
    %v141 = vmax.f32 %v140, 0.0
    %v142 = vpack.c.bf16 %v141, %v141
    %v143 = vld [vmem:[%s3] sm:$0xf]
    %v144 = vld [vmem:[%s3 + $0x4] sm:$0xf]
    %v145 = vld [vmem:[%s7 + $0x1] sm:$0x1]
    %v146 = vlaneseq
    %v147 = vshrl.u32 %v146, 7
    %v148 = vsub.s32 0, %v147
    %v149 = vrot.slane %v145, %v148
    %v152 = vunpack.c.l.b16 %v143
    %v153 = vunpack.c.l.b16 %v144
    %v154 = vpack.c.b16 %v153, %v152
    %vm156 = vcmask 130048
    %v158 = vsel %vm156, %v142, 0
    %160 = vmatprep.subr.bf16.mxu0 0
    %161 = vmatpush1.bf16.msra.mxu0 %v154
    %162 = vmatprep.subr.bf16.mxu0 0
    %163 = vmatpush1.bf16.msra.mxu0 0
    %164 = vmatprep.subr.bf16.mxu0 0
    %165 = vmatpush1.bf16.msra.mxu0 0
    %166 = vmatprep.subr.bf16.mxu0 0
    %167 = vmatpush1.bf16.msra.mxu0 0
    %168 = vmatprep.subr.bf16.mxu0 0
    %169 = vmatpush1.bf16.msra.mxu0 0
    %170 = vmatprep.subr.bf16.mxu0 0
    %171 = vmatpush1.bf16.msra.mxu0 0
    %172 = vmatprep.subr.bf16.mxu0 0
    %173 = vmatpush1.bf16.msra.mxu0 0
    %174 = vmatprep.subr.bf16.mxu0 0
    %175 = vmatpush1.bf16.msra.mxu0 0
    %176 = vmatprep.subr.bf16.mxu0 0
    %177 = vmatpush1.bf16.msra.mxu0 0
    %178 = vmatprep.subr.bf16.mxu0 0
    %179 = vmatpush1.bf16.msra.mxu0 0
    %180 = vmatprep.subr.bf16.mxu0 0
    %181 = vmatpush1.bf16.msra.mxu0 0
    %182 = vmatprep.subr.bf16.mxu0 0
    %183 = vmatpush1.bf16.msra.mxu0 0
    %184 = vmatprep.subr.bf16.mxu0 0
    %185 = vmatpush1.bf16.msra.mxu0 0
    %186 = vmatprep.subr.bf16.mxu0 0
    %187 = vmatpush1.bf16.msra.mxu0 0
    %188 = vmatprep.subr.bf16.mxu0 0
    %189 = vmatpush1.bf16.msra.mxu0 0
    %190 = vmatprep.subr.bf16.mxu0 0
    %191 = vmatpush1.bf16.msra.mxu0 0
    %192 = vmatprep.mubr.bf16.mxu0 0
    %193 = vmatmul.mubr.bf16.gmra.mrb[0].mxu0 %v158
    %v194 = vpop.f32.mrb[0].mxu0
    %v195 = vadd.f32 %v149, %v194
    %v196 = vpop.f32.mrb[0].mxu0
    %v197 = vpop.f32.mrb[0].mxu0
    %v198 = vpop.f32.mrb[0].mxu0
    %199 = vdwg.mxu0
    %v200 = vpack.c.bf16 %v73, %v73
    %v201 = vld [vmem:[%s4] sm:$0xf]
    %v202 = vld [vmem:[%s4 + $0x4] sm:$0xf]
    %v203 = vld [vmem:[%s4 + $0x8] sm:$0xf]
    %v204 = vld [vmem:[%s4 + $0xc] sm:$0xf]
    %v209 = vunpack.c.l.b16 %v201
    %v210 = vunpack.c.l.b16 %v202
    %v211 = vunpack.c.l.b16 %v203
    %v212 = vunpack.c.l.b16 %v204
    %v213 = vpack.c.b16 %v210, %v209
    %v214 = vpack.c.b16 %v212, %v211
    %v218 = vsel %vm91, %v200, 0
    %220 = vmatprep.subr.bf16.mxu0 0
    %221 = vmatpush1.bf16.msra.mxu0 %v213
    %222 = vmatprep.subr.bf16.mxu0 0
    %223 = vmatpush1.bf16.msra.mxu0 %v214
    %224 = vmatprep.subr.bf16.mxu0 0
    %225 = vmatpush1.bf16.msra.mxu0 0
    %226 = vmatprep.subr.bf16.mxu0 0
    %227 = vmatpush1.bf16.msra.mxu0 0
    %228 = vmatprep.subr.bf16.mxu0 0
    %229 = vmatpush1.bf16.msra.mxu0 0
    %230 = vmatprep.subr.bf16.mxu0 0
    %231 = vmatpush1.bf16.msra.mxu0 0
    %232 = vmatprep.subr.bf16.mxu0 0
    %233 = vmatpush1.bf16.msra.mxu0 0
    %234 = vmatprep.subr.bf16.mxu0 0
    %235 = vmatpush1.bf16.msra.mxu0 0
    %236 = vmatprep.subr.bf16.mxu0 0
    %237 = vmatpush1.bf16.msra.mxu0 0
    %238 = vmatprep.subr.bf16.mxu0 0
    %239 = vmatpush1.bf16.msra.mxu0 0
    %240 = vmatprep.subr.bf16.mxu0 0
    %241 = vmatpush1.bf16.msra.mxu0 0
    %242 = vmatprep.subr.bf16.mxu0 0
    %243 = vmatpush1.bf16.msra.mxu0 0
    %244 = vmatprep.subr.bf16.mxu0 0
    %245 = vmatpush1.bf16.msra.mxu0 0
    %246 = vmatprep.subr.bf16.mxu0 0
    %247 = vmatpush1.bf16.msra.mxu0 0
    %248 = vmatprep.subr.bf16.mxu0 0
    %249 = vmatpush1.bf16.msra.mxu0 0
    %250 = vmatprep.subr.bf16.mxu0 0
    %251 = vmatpush1.bf16.msra.mxu0 0
    %252 = vmatprep.mubr.bf16.mxu0 0
    %253 = vmatmul.mubr.bf16.gmra.mrb[0].mxu0 %v218
    %v254 = vpop.f32.mrb[0].mxu0
    %v255 = vadd.f32 0.0, %v254
    %v256 = vpop.f32.mrb[0].mxu0
    %v257 = vpop.f32.mrb[0].mxu0
    %v258 = vpop.f32.mrb[0].mxu0
    %259 = vdwg.mxu0
    %v260 = vld [vmem:[%s7 + $0x2] sm:$0x1]
    %262 = vset.pattern.permute.xlu0 0
    %263 = vperm.xlu0 %262, %v195
    %v264 = vpop.permute.xlu0 %263
    %v266 = vlaneseq
    %v267 = vshrl.u32 %v266, 7
    %v268 = vsub.s32 0, %v267
    %v269 = vrot.slane %v260, %v268
    %v270 = vmul.f32 %v264, %v269
    %272 = vrot.lane.b32.xlu0 %v270, 16
    %v273 = vpop.permute.xlu0 %272
    %v275 = vadd.f32 %v130, %v273
    %277 = vrot.lane.b32.xlu0 %v255, 16
    %v278 = vpop.permute.xlu0 %277
    %v280 = vadd.f32 %v275, %v278
    %v281 = vld [vmem:[%s7 + $0x3] sm:$0x1]
    %v282 = vlaneseq
    %v283 = vshrl.u32 %v282, 7
    %v284 = vsub.s32 0, %v283
    %v285 = vrot.slane %v281, %v284
    %287 = vrot.lane.b32.xlu0 %v285, 16
    %v288 = vpop.permute.xlu0 %287
    %v290 = vadd.f32 %v280, %v288
    %v291 = vpack.c.bf16 %v290, %v290
    %v292 = vld [vmem:[#allocation7] sm:$0xf]
    %v293 = vld [vmem:[#allocation7 + $0x4] sm:$0xf]
    %v294 = vld [vmem:[#allocation7 + $0x8] sm:$0xf]
    %v295 = vld [vmem:[#allocation7 + $0xc] sm:$0xf]
    %297 = vrot.lane.b32.xlu0 %v291, 112
    %v298 = vpop.permute.xlu0 %297
    %v303 = vunpack.c.l.b16 %v292
    %v304 = vunpack.c.l.b16 %v293
    %v305 = vunpack.c.l.b16 %v294
    %v306 = vunpack.c.l.b16 %v295
    %v307 = vpack.c.b16 %v304, %v303
    %v308 = vpack.c.b16 %v306, %v305
    %v312 = vsel %vm91, %v298, 0
    %314 = vmatprep.subr.bf16.mxu0 0
    %315 = vmatpush1.bf16.msra.mxu0 %v307
    %316 = vmatprep.subr.bf16.mxu0 0
    %317 = vmatpush1.bf16.msra.mxu0 %v308
    %318 = vmatprep.subr.bf16.mxu0 0
    %319 = vmatpush1.bf16.msra.mxu0 0
    %320 = vmatprep.subr.bf16.mxu0 0
    %321 = vmatpush1.bf16.msra.mxu0 0
    %322 = vmatprep.subr.bf16.mxu0 0
    %323 = vmatpush1.bf16.msra.mxu0 0
    %324 = vmatprep.subr.bf16.mxu0 0
    %325 = vmatpush1.bf16.msra.mxu0 0
    %326 = vmatprep.subr.bf16.mxu0 0
    %327 = vmatpush1.bf16.msra.mxu0 0
    %328 = vmatprep.subr.bf16.mxu0 0
    %329 = vmatpush1.bf16.msra.mxu0 0
    %330 = vmatprep.subr.bf16.mxu0 0
    %331 = vmatpush1.bf16.msra.mxu0 0
    %332 = vmatprep.subr.bf16.mxu0 0
    %333 = vmatpush1.bf16.msra.mxu0 0
    %334 = vmatprep.subr.bf16.mxu0 0
    %335 = vmatpush1.bf16.msra.mxu0 0
    %336 = vmatprep.subr.bf16.mxu0 0
    %337 = vmatpush1.bf16.msra.mxu0 0
    %338 = vmatprep.subr.bf16.mxu0 0
    %339 = vmatpush1.bf16.msra.mxu0 0
    %340 = vmatprep.subr.bf16.mxu0 0
    %341 = vmatpush1.bf16.msra.mxu0 0
    %342 = vmatprep.subr.bf16.mxu0 0
    %343 = vmatpush1.bf16.msra.mxu0 0
    %344 = vmatprep.subr.bf16.mxu0 0
    %345 = vmatpush1.bf16.msra.mxu0 0
    %346 = vmatprep.mubr.bf16.mxu0 0
    %347 = vmatmul.mubr.bf16.gmra.mrb[0].mxu0 %v312
    %v348 = vpop.f32.mrb[0].mxu0
    %v349 = vadd.f32 0.0, %v348
    %v350 = vpop.f32.mrb[0].mxu0
    %v351 = vpop.f32.mrb[0].mxu0
    %v352 = vpop.f32.mrb[0].mxu0
    %353 = vdwg.mxu0
    %354 = vrot.lane.b32.xlu0 %v255, 96
    %v355 = vpop.permute.xlu0 %354
    %v357 = vadd.f32 %v349, %v355
    %v358 = vld [vmem:[%s7 + $0x4] sm:$0x1]
    %v359 = vlaneseq
    %v360 = vshrl.u32 %v359, 7
    %v361 = vsub.s32 0, %v360
    %v362 = vrot.slane %v358, %v361
    %v363 = vadd.f32 %v357, %v362
    %v364 = vxor.u32 %v363, 2147483648
    %v365 = vmul.f32 %v364, 1.442695
    %v366 = vpow.pop %v365
    %v367 = vadd.f32 %v366, 1.0
    %v368 = vrcp.pop %v367
    %v369 = vmul.f32 1.0, %v368
    %v370 = vld [vmem:[%s7 + $0x5] sm:$0x1]
    %v371 = vlaneseq
    %v372 = vshrl.u32 %v371, 7
    %v373 = vsub.s32 0, %v372
    %v374 = vrot.slane %v370, %v373
    %376 = vrot.lane.b32.xlu0 %v374, 64
    %v377 = vpop.permute.xlu0 %376
    %v379 = vadd.f32 %v349, %v377
    %v380 = vld [vmem:[%s7 + $0x6] sm:$0x1]
    %v381 = vlaneseq
    %v382 = vshrl.u32 %v381, 7
    %v383 = vsub.s32 0, %v382
    %v384 = vrot.slane %v380, %v383
    %386 = vrot.lane.b32.xlu0 %v384, 96
    %v387 = vpop.permute.xlu0 %386
    %v389 = vadd.f32 %v255, %v387
    %391 = vrot.lane.b32.xlu0 %v389, 32
    %v392 = vpop.permute.xlu0 %391
    %v394 = vmul.f32 %v369, %v392
    %396 = vrot.lane.b32.xlu0 %v394, 64
    %v397 = vpop.permute.xlu0 %396
    %v399 = vadd.f32 %v379, %v397
    %v400 = vtanh.pop %v399
    %v401 = vsub.f32 1.0, %v369
    %403 = vrot.lane.b32.xlu0 %v400, 96
    %v404 = vpop.permute.xlu0 %403
    %v406 = vmul.f32 %v401, %v404
    %408 = vrot.lane.b32.xlu0 %v73, 32
    %v409 = vpop.permute.xlu0 %408
    %v411 = vmul.f32 %v369, %v409
    %v412 = vadd.f32 %v406, %v411
    %v413 = vpack.c.bf16 %v412, %v412
    %v414 = vld [vmem:[%s6] sm:$0xf]
    %v415 = vld [vmem:[%s6 + $0x4] sm:$0xf]
    %v416 = vld [vmem:[%s6 + $0x8] sm:$0xf]
    %v417 = vld [vmem:[%s6 + $0xc] sm:$0xf]
    %v418 = vld [vmem:[%s7 + $0x7] sm:$0x1]
    %v419 = vlaneseq
    %v420 = vshrl.u32 %v419, 7
    %v421 = vsub.s32 0, %v420
    %v422 = vrot.slane %v418, %v421
    %424 = vrot.lane.b32.xlu0 %v413, 96
    %v425 = vpop.permute.xlu0 %424
    %v430 = vunpack.c.l.b16 %v414
    %v431 = vunpack.c.l.b16 %v415
    %v432 = vunpack.c.l.b16 %v416
    %v433 = vunpack.c.l.b16 %v417
    %v434 = vpack.c.b16 %v431, %v430
    %v435 = vpack.c.b16 %v433, %v432
    %v439 = vsel %vm91, %v425, 0
    %441 = vmatprep.subr.bf16.mxu0 0
    %442 = vmatpush1.bf16.msra.mxu0 %v434
    %443 = vmatprep.subr.bf16.mxu0 0
    %444 = vmatpush1.bf16.msra.mxu0 %v435
    %445 = vmatprep.subr.bf16.mxu0 0
    %446 = vmatpush1.bf16.msra.mxu0 0
    %447 = vmatprep.subr.bf16.mxu0 0
    %448 = vmatpush1.bf16.msra.mxu0 0
    %449 = vmatprep.subr.bf16.mxu0 0
    %450 = vmatpush1.bf16.msra.mxu0 0
    %451 = vmatprep.subr.bf16.mxu0 0
    %452 = vmatpush1.bf16.msra.mxu0 0
    %453 = vmatprep.subr.bf16.mxu0 0
    %454 = vmatpush1.bf16.msra.mxu0 0
    %455 = vmatprep.subr.bf16.mxu0 0
    %456 = vmatpush1.bf16.msra.mxu0 0
    %457 = vmatprep.subr.bf16.mxu0 0
    %458 = vmatpush1.bf16.msra.mxu0 0
    %459 = vmatprep.subr.bf16.mxu0 0
    %460 = vmatpush1.bf16.msra.mxu0 0
    %461 = vmatprep.subr.bf16.mxu0 0
    %462 = vmatpush1.bf16.msra.mxu0 0
    %463 = vmatprep.subr.bf16.mxu0 0
    %464 = vmatpush1.bf16.msra.mxu0 0
    %465 = vmatprep.subr.bf16.mxu0 0
    %466 = vmatpush1.bf16.msra.mxu0 0
    %467 = vmatprep.subr.bf16.mxu0 0
    %468 = vmatpush1.bf16.msra.mxu0 0
    %469 = vmatprep.subr.bf16.mxu0 0
    %470 = vmatpush1.bf16.msra.mxu0 0
    %471 = vmatprep.subr.bf16.mxu0 0
    %472 = vmatpush1.bf16.msra.mxu0 0
    %473 = vmatprep.mubr.bf16.mxu0 0
    %474 = vmatmul.mubr.bf16.gmra.mrb[0].mxu0 %v439
    %v475 = vpop.f32.mrb[0].mxu0
    %v476 = vadd.f32 %v422, %v475
    %v477 = vpop.f32.mrb[0].mxu0
    %v478 = vpop.f32.mrb[0].mxu0
    %v479 = vpop.f32.mrb[0].mxu0
    %480 = vdwg.mxu0
    %482 = vrot.lane.b32.xlu0 %v412, 96
    %v483 = vpop.permute.xlu0 %482
    %vm485 = vcmask 254976
    %486 = vst.msk [vmem:[#allocation8] sm:$0x3] %vm485, %v483
    %vm487 = vcmask 58368
    %488 = vst.msk [vmem:[#allocation9] sm:$0x3] %vm487, %v476
    %vm489 = vcmask 1024
    %490 = vst.msk [vmem:[%s10] sm:$0x3] %vm489, %v195
    // Predicated region
    $region46: #{tpu_custom_call.1} parent=1 // pred_check
      _
    $region47: #{tpu_custom_call.1} parent=1 // pred_check_branch
      %492 = sbr.rel (0) target = $region49
    $region48: #{tpu_custom_call.1} parent=1 // pred_region
      %s494 = ssub.s32 32, 32
      %495 = vsyncadd [#allocation4], %s494
      %s497 = sshll.u32 [#allocation8], 4
      %s498 = int_to_ptr.vmem [resolvable:$true] %s497
      %500 = dma.vmem_to_hbm [thread:$0]  %s498, 32, %s8, [#allocation4]
    $region49: #{tpu_custom_call.1} parent=1 // pred_fallthru
      _
    // Predicated region
    $region50: #{tpu_custom_call.1} parent=1 // pred_check
      _
    $region51: #{tpu_custom_call.1} parent=1 // pred_check_branch
      %502 = sbr.rel (0) target = $region53
    $region52: #{tpu_custom_call.1} parent=1 // pred_region
      %s504 = ssub.s32 32, 32
      %505 = vsyncadd [#allocation10], %s504
      %s507 = sshll.u32 [#allocation9], 4
      %s508 = int_to_ptr.vmem [resolvable:$true] %s507
      %510 = dma.vmem_to_hbm [thread:$0]  %s508, 32, %s9, [#allocation10]
    $region53: #{tpu_custom_call.1} parent=1 // pred_fallthru
      _
    // Predicated region
    $region54: #{tpu_custom_call.1} parent=1 // pred_check
      _
    $region55: #{tpu_custom_call.1} parent=1 // pred_check_branch
      %512 = sbr.rel (0) target = $region57
    $region56: #{tpu_custom_call.1} parent=1 // pred_region
      _
    $region57: #{tpu_custom_call.1} parent=1 // pred_fallthru
      _
    // Predicated region
    $region58: #{tpu_custom_call.1} parent=1 // pred_check
      _
    $region59: #{tpu_custom_call.1} parent=1 // pred_check_branch
      %514 = sbr.rel (0) target = $region61
    $region60: #{tpu_custom_call.1} parent=1 // pred_region
      %515 = dma.done [#allocation4], 32
    $region61: #{tpu_custom_call.1} parent=1 // pred_fallthru
      _
    // Predicated region
    $region62: #{tpu_custom_call.1} parent=1 // pred_check
      _
    $region63: #{tpu_custom_call.1} parent=1 // pred_check_branch
      %517 = sbr.rel (0) target = $region65
    $region64: #{tpu_custom_call.1} parent=1 // pred_region
      %518 = dma.done [#allocation10], 32
    $region65: #{tpu_custom_call.1} parent=1 // pred_fallthru
      _
    // Predicated region
    $region66: #{tpu_custom_call.1} parent=1 // pred_check
      _
    $region67: #{tpu_custom_call.1} parent=1 // pred_check_branch
      %520 = sbr.rel (0) target = $region69
    $region68: #{tpu_custom_call.1} parent=1 // pred_region
      _
    $region69: #{tpu_custom_call.1} parent=1 // pred_fallthru
      _
    %521 = vsyncpa [#allocation3], 1
    %522 = vsyncpa [#allocation6], 1
    %523 = vsyncpa [#allocation4], 1
    %524 = vsyncpa [#allocation10], 1

</llo_original>
